<compile_context>
chip_gen: v7x
topology: tpu7x:2x2x1
jax: 0.10.0
libtpu: 0.0.40
codegen_flags: <defaults>
</compile_context>

<pallas_src>
import functools

import jax
import jax.numpy as jnp
from jax.experimental import pallas as pl
from jax.experimental.pallas import tpu as pltpu


_LANE = 128
_HALO_LANES = 128      # halo slab width per L-tile (>= K-1, lane aligned)


def _round_up(a, b):
    return ((a + b - 1) // b) * b


def _vmem_capacity_bytes():
    try:
        return int(pltpu.get_tpu_info().vmem_capacity_bytes)
    except Exception:
        return 64 * 1024 * 1024     # conservative default (v7x per-TensorCore)


def _vmem_need_bytes(tl, c_in, c_out, k):
    """Rough VMEM model: double-buffered pipeline blocks + resident weight + temporaries."""
    f32, bf16 = 4, 2
    pipelined = 2 * (c_in * tl * f32               # x tile (f32)
                     + c_in * _HALO_LANES * bf16   # halo tile
                     + c_out * tl * f32)           # output tile
    weight = 2 * k * c_out * c_in * bf16           # resident, counted double-buffered
    working = (k * c_in * (tl + _HALO_LANES) * bf16  # bf16 tile + shifted tap views
               + c_out * tl * f32                    # f32 accumulator
               + c_in * tl * bf16)
    return pipelined + weight + working


def _pick_tile(l_out, batch, c_in, c_out, k, budget_bytes):
    """L tile: multiple of 128 (lane-dense stores), VMEM-budgeted, grid kept >=4 deep."""
    tl = min(1024, _round_up(max(l_out, 1), _LANE))
    while tl > _LANE and _vmem_need_bytes(tl, c_in, c_out, k) > budget_bytes:
        tl -= _LANE
    # Keep >= ~4 grid steps so the per-step DMA is hidden by the pipeline and
    # multi-TensorCore chips (v7x) have parallel work; don't go below 256 lanes.
    while tl > 256 and batch * pl.cdiv(l_out, tl) < 4:
        tl -= _LANE
    return tl


def _conv1d_relu_kernel(x_ref, h_ref, w_ref, o_ref, *, k_taps, tl):
    # x_ref: (C_in, TL)        input tile in native NCL layout (lane-dense L), x dtype
    # h_ref: (C_in, 128) bf16  halo: column j (< K-1) holds x[:, (t+1)*TL + j]
    # w_ref: (K, C_out, C_in)  bf16 weight, resident across the whole grid
    # o_ref: (C_out, TL)       output tile
    x = x_ref[...].astype(jnp.bfloat16)
    acc = jnp.dot(w_ref[0], x, preferred_element_type=jnp.float32)   # tap 0
    if k_taps > 1:
        ext = jnp.concatenate([x, h_ref[...]], axis=-1)              # (C_in, TL+128)
        for k in range(1, k_taps):
            acc += jnp.dot(w_ref[k], ext[:, k:k + tl],
                           preferred_element_type=jnp.float32)       # tap k
    o_ref[...] = jnp.maximum(acc, 0.0).astype(o_ref.dtype)           # ReLU on f32 acc


def conv1d_relu_pallas(x_ncl, weight_oik, *, stride=1, padding=0):
    """y = ReLU(Conv1d(x)); x: (B, C_in, L), weight: (C_out, C_in, K) -> (B, C_out, L_out)."""
    assert stride == 1 and padding == 0, "defaults of RandomCNN1d"
    B, C_in, L = x_ncl.shape
    C_out, C_in_w, K = weight_oik.shape
    assert C_in == C_in_w
    assert K == 1 or (K - 1) <= _HALO_LANES
    L_out = L - K + 1
    assert L_out >= 1

    cap = _vmem_capacity_bytes()
    budget = (2 * cap) // 5
    TL = _pick_tile(L_out, B, C_in, C_out, K, budget)
    n_t = pl.cdiv(L_out, TL)

    # Weight as (K, C_out, C_in) in bf16 (MXU operand dtype; accumulation is f32).
    w = jnp.transpose(weight_oik, (2, 0, 1)).astype(jnp.bfloat16)

    # Tiny halo slab: for L-tile t, columns [t*128, t*128 + K - 1) hold
    # x[:, :, (t+1)*TL + j] (zero when out of range).  This is what lets the
    # kernel read x directly (no 2x im2col copy of x materialized in HBM).
    if K > 1:
        src = (jnp.arange(n_t)[:, None] + 1) * TL + jnp.arange(K - 1)[None, :]
        valid = (src < L).reshape(-1)
        gathered = jnp.take(x_ncl, jnp.minimum(src, L - 1).reshape(-1), axis=2)
        gathered = jnp.where(valid[None, None, :], gathered, 0.0)
        gathered = gathered.reshape(B, C_in, n_t, K - 1).astype(jnp.bfloat16)
        halo = jnp.pad(gathered,
                       ((0, 0), (0, 0), (0, 0), (0, _HALO_LANES - (K - 1))))
        halo = halo.reshape(B, C_in, n_t * _HALO_LANES)
    else:
        halo = jnp.zeros((B, C_in, n_t * _HALO_LANES), jnp.bfloat16)

    itemsize = jnp.dtype(x_ncl.dtype).itemsize
    cost = pl.CostEstimate(
        flops=2 * B * L_out * K * C_in * C_out,
        transcendentals=0,
        bytes_accessed=(x_ncl.size * itemsize + halo.size * 2 + w.size * 2
                        + B * C_out * L_out * itemsize),
    )

    need = _vmem_need_bytes(TL, C_in, C_out, K)
    vmem_limit = int(min((3 * cap) // 4, max(need + (16 << 20), 32 << 20)))

    kernel = functools.partial(_conv1d_relu_kernel, k_taps=K, tl=TL)

    return pl.pallas_call(
        kernel,
        out_shape=jax.ShapeDtypeStruct((B, C_out, L_out), x_ncl.dtype),
        grid=(B, n_t),
        in_specs=[
            # x streamed in native layout; last block may be partial (garbage
            # columns only feed masked output columns).
            pl.BlockSpec((None, C_in, TL), lambda b, t: (b, 0, t)),
            # Per-tile halo columns.
            pl.BlockSpec((None, C_in, _HALO_LANES), lambda b, t: (b, 0, t)),
            # Whole weight, constant block index -> fetched once, stays resident.
            pl.BlockSpec((K, C_out, C_in), lambda b, t: (0, 0, 0)),
        ],
        out_specs=pl.BlockSpec((None, C_out, TL), lambda b, t: (b, 0, t)),
        compiler_params=pltpu.CompilerParams(
            dimension_semantics=("parallel", "parallel"),
            vmem_limit_bytes=vmem_limit,
        ),
        cost_estimate=cost,
    )(x_ncl, halo, w)


class RandomCNN1dPallas:
    """Mirror of RandomCNN1d defaults (n_layers=1, no bias/bn/stack)."""

    def __init__(self, n_fft_bins, n_filters=512, kernel_size=2, key=None):
        key = jax.random.PRNGKey(0) if key is None else key
        # Deterministic synthetic weight, PyTorch Conv1d shape (C_out, C_in, K).
        fan_in = n_fft_bins * kernel_size
        bound = 1.0 / jnp.sqrt(jnp.float32(fan_in))
        self.weights = {
            "conv0": jax.random.uniform(
                key, (n_filters, n_fft_bins, kernel_size),
                minval=-bound, maxval=bound, dtype=jnp.float32),
        }

    def forward(self, x, out_keys):
        out = {}
        out["conv0"] = conv1d_relu_pallas(x, self.weights["conv0"])
        return [out[k] for k in out_keys]


def _conv1d_relu_ref(x, w):
    """Pure-JAX f32 reference of the same conv+relu."""
    L_out = x.shape[-1] - w.shape[-1] + 1
    r = jnp.zeros((x.shape[0], w.shape[0], L_out), jnp.float32)
    for k in range(w.shape[-1]):
        r = r + jnp.einsum("bcl,oc->bol", x[:, :, k:k + L_out], w[:, :, k])
    return jnp.maximum(r, 0.0)


if __name__ == "__main__":
    key = jax.random.PRNGKey(0)
    kx, kw, kx2, kx3 = jax.random.split(key, 4)

    B, n_fft_bins, L = 2, 16, 32          # batch, input channels, sequence length
    n_filters, kernel_size = 32, 2        # small analogue of the 512-filter default

    x = jax.random.normal(kx, (B, n_fft_bins, L), dtype=jnp.float32)  # NCL like PyTorch

    model = RandomCNN1dPallas(n_fft_bins, n_filters=n_filters,
                              kernel_size=kernel_size, key=kw)
    (y,) = model.forward(x, out_keys=["conv0"])
    y = jax.block_until_ready(y)

    ref = _conv1d_relu_ref(x, model.weights["conv0"])
    assert y.shape == (B, n_filters, L - kernel_size + 1)
    # bf16 MXU operands -> loosened tolerance vs f32 reference.
    assert jnp.allclose(y, ref, atol=2e-2, rtol=2e-2)

    # Tiled-L path: multiple L tiles, partial (masked) last tile, real cross-tile halo.
    x2 = jax.random.normal(kx2, (B, n_fft_bins, 300), dtype=jnp.float32)
    y2 = jax.block_until_ready(conv1d_relu_pallas(x2, model.weights["conv0"]))
    assert jnp.allclose(y2, _conv1d_relu_ref(x2, model.weights["conv0"]),
                        atol=2e-2, rtol=2e-2)

    # L_out an exact multiple of the tile: halo column is the last valid x column.
    x3 = jax.random.normal(kx3, (B, n_fft_bins, 257), dtype=jnp.float32)
    y3 = jax.block_until_ready(conv1d_relu_pallas(x3, model.weights["conv0"]))
    assert jnp.allclose(y3, _conv1d_relu_ref(x3, model.weights["conv0"]),
                        atol=2e-2, rtol=2e-2)

    print("KERNEL_OK")
</pallas_src>

<mosaic_0001>
module attributes {stable_mosaic.version = 11 : i64} {
  func.func @_conv1d_relu_kernel(%arg0: i32, %arg1: i32, %arg2: memref<1x16x128xf32, #tpu.memory_space<vmem>>, %arg3: memref<1x16x128xbf16, #tpu.memory_space<vmem>>, %arg4: memref<2x32x16xbf16, #tpu.memory_space<vmem>>, %arg5: memref<1x32x128xf32, #tpu.memory_space<vmem>>) attributes {dimension_semantics = [#tpu.dimension_semantics<parallel>, #tpu.dimension_semantics<parallel>], iteration_bounds = array<i64: 2, 1>, scalar_prefetch = 0 : i64, scratch_operands = 0 : i64, tpu.core_type = #tpu.core_type<tc>, window_params = [{transform_indices = @transform_0, window_bounds = array<i64: 1, 16, 128>}, {transform_indices = @transform_1, window_bounds = array<i64: 1, 16, 128>}, {pipeline_mode = #tpu.pipeline_mode<synchronous>, transform_indices = @transform_2, window_bounds = array<i64: 2, 32, 16>}, {transform_indices = @transform_3, window_bounds = array<i64: 1, 32, 128>}]} {
    %c0 = arith.constant 0 : index
    %c0_0 = arith.constant 0 : index
    %c0_1 = arith.constant 0 : index
    %0 = vector.load %arg2[%c0, %c0_0, %c0_1] : memref<1x16x128xf32, #tpu.memory_space<vmem>>, vector<1x16x128xf32>
    %1 = vector.shape_cast %0 : vector<1x16x128xf32> to vector<16x128xf32>
    %2 = arith.truncf %1 : vector<16x128xf32> to vector<16x128xbf16>
    %c0_2 = arith.constant 0 : index
    %c0_3 = arith.constant 0 : index
    %c0_4 = arith.constant 0 : index
    %3 = vector.load %arg4[%c0_2, %c0_3, %c0_4] : memref<2x32x16xbf16, #tpu.memory_space<vmem>>, vector<1x32x16xbf16>
    %4 = vector.shape_cast %3 : vector<1x32x16xbf16> to vector<32x16xbf16>
    %cst = arith.constant dense<0.000000e+00> : vector<32x128xf32>
    %5 = tpu.matmul %4, %2, %cst {dimension_numbers = #tpu.dot_dimension_numbers<[1], [0], [0], [1], [0, 0, 1, 1], [], []>} : vector<32x16xbf16>, vector<16x128xbf16>, vector<32x128xf32> -> vector<32x128xf32>
    %c0_5 = arith.constant 0 : index
    %c0_6 = arith.constant 0 : index
    %c0_7 = arith.constant 0 : index
    %6 = vector.load %arg3[%c0_5, %c0_6, %c0_7] : memref<1x16x128xbf16, #tpu.memory_space<vmem>>, vector<1x16x128xbf16>
    %7 = vector.shape_cast %6 : vector<1x16x128xbf16> to vector<16x128xbf16>
    %8 = tpu.concatenate %2, %7 in 1 : vector<16x128xbf16>, vector<16x128xbf16> -> vector<16x256xbf16>
    %c1 = arith.constant 1 : index
    %c0_8 = arith.constant 0 : index
    %c0_9 = arith.constant 0 : index
    %9 = vector.load %arg4[%c1, %c0_8, %c0_9] : memref<2x32x16xbf16, #tpu.memory_space<vmem>>, vector<1x32x16xbf16>
    %10 = vector.shape_cast %9 : vector<1x32x16xbf16> to vector<32x16xbf16>
    %11 = vector.extract_strided_slice %8 {offsets = [0, 1], sizes = [16, 128], strides = [1, 1]} : vector<16x256xbf16> to vector<16x128xbf16>
    %cst_10 = arith.constant dense<0.000000e+00> : vector<32x128xf32>
    %12 = tpu.matmul %10, %11, %cst_10 {dimension_numbers = #tpu.dot_dimension_numbers<[1], [0], [0], [1], [0, 0, 1, 1], [], []>} : vector<32x16xbf16>, vector<16x128xbf16>, vector<32x128xf32> -> vector<32x128xf32>
    %13 = arith.addf %5, %12 : vector<32x128xf32>
    %cst_11 = arith.constant 0.000000e+00 : f32
    %14 = vector.broadcast %cst_11 : f32 to vector<32x128xf32>
    %15 = arith.maximumf %13, %14 : vector<32x128xf32>
    %c0_12 = arith.constant 0 : index
    %c0_13 = arith.constant 0 : index
    %c0_14 = arith.constant 0 : index
    %16 = vector.load %arg5[%c0_12, %c0_13, %c0_14] : memref<1x32x128xf32, #tpu.memory_space<vmem>>, vector<1x32x128xf32>
    %17 = vector.shape_cast %16 : vector<1x32x128xf32> to vector<32x128xf32>
    %18 = vector.shape_cast %15 : vector<32x128xf32> to vector<1x32x128xf32>
    tpu.vector_store %arg5[%c0_12, %c0_13, %c0_14], %18 {strides = array<i32>} : memref<1x32x128xf32, #tpu.memory_space<vmem>>, vector<1x32x128xf32>,
    return
  }
  func.func @transform_0(%arg0: i32, %arg1: i32) -> (i32, i32, i32) {
    %c0_i32 = arith.constant 0 : i32
    %c0_i32_0 = arith.constant 0 : i32
    return %arg0, %c0_i32, %arg1 : i32, i32, i32
  }
  func.func @transform_1(%arg0: i32, %arg1: i32) -> (i32, i32, i32) {
    %c0_i32 = arith.constant 0 : i32
    %c0_i32_0 = arith.constant 0 : i32
    return %arg0, %c0_i32, %arg1 : i32, i32, i32
  }
  func.func @transform_2(%arg0: i32, %arg1: i32) -> (i32, i32, i32) {
    %c0_i32 = arith.constant 0 : i32
    %c0_i32_0 = arith.constant 0 : i32
    %c0_i32_1 = arith.constant 0 : i32
    %c0_i32_2 = arith.constant 0 : i32
    return %c0_i32, %c0_i32_0, %c0_i32_1 : i32, i32, i32
  }
  func.func @transform_3(%arg0: i32, %arg1: i32) -> (i32, i32, i32) {
    %c0_i32 = arith.constant 0 : i32
    %c0_i32_0 = arith.constant 0 : i32
    return %arg0, %c0_i32, %arg1 : i32, i32, i32
  }
}

</mosaic_0001>

<llo_original>
// kernel: tpu_custom_call.1
$region0: #{tpu_custom_call.1}
  #allocation0 [shape = 'u32[]', space=smem, size = 0x4, offset = 0x4, fixed_abs, tag = 'smem constant byte address 0x4 - core index']
  #allocation1 [shape = 'u32[144,128]{1,0:T(1,128)}', space=vmem, size = 0x12000, scoped, tag = 'internal scratch']
  %s0 = inlined_call_operand.vmem [shape: f32[2,16,32], index: 0, kind: input, shape index: {}]
  %s1 = inlined_call_operand.vmem [shape: bf16[2,16,128], index: 1, kind: input, shape index: {}]
  %s2 = inlined_call_operand.vmem [shape: bf16[2,32,16], index: 2, kind: input, shape index: {}]
  %s3 = inlined_call_operand.vmem [shape: f32[2,32,31], index: 3, kind: output, shape index: {}]
  %s4 = sld [smem:[#allocation0]]
  $region45: #{tpu_custom_call.1} parent=0
    _
  %s6 = ssub.s32 1, %s4
  %s7 = scalar_select 0, %s6, %s4
  loop: start=0, step=1, limit=4
  $region2: #{tpu_custom_call.1} parent=0 // loop_pre_header
    _
  $region3: #{tpu_custom_call.1} parent=0 // loop_header
    %s9 = sphi 0, %s13
    %p10 = scmp.ge.s32.totalorder %s9, 4
    %s16 = sphi 0, %s28
    %s17 = sphi 0, %s24
    %s18 = sphi 0, %s16
    %s19 = sphi 0, %s17
    %s20 = sphi 0, %s18
    %s21 = sphi 0, %s19
    %s33 = sphi 0, %s35
    %s36 = sphi 0, %s33
    %s37 = sphi 0, %s36
    %s53 = sphi 0, %s37
    %s61 = sphi 0, %s63
    %s64 = sphi 0, %s61
    %s65 = sphi 0, %s64
    %s81 = sphi 0, %s65
    %s85 = sphi 0, %s85
    %s87 = sphi 0, %s85
    %s88 = sphi 0, %s87
    %s102 = sphi 0, %s88
    %s110 = sphi 0, %s112
    %s113 = sphi 0, %s110
    %s114 = sphi 0, %s113
    %s130 = sphi 0, %s114
  $region4: #{tpu_custom_call.1} parent=0 // loop_header_branch
    %12 = sbr.rel (%p10) target = $region8
  $region5: #{tpu_custom_call.1} parent=0 // loop_body
    %s14 = ssub.s32 %s9, 1
    %s15 = ssub.s32 %s9, 2
    %s22 = sadd.s32 1, %s17
    %p23 = scmp.ge.s32.totalorder %s22, 1
    %s24 = scalar_select %p23, 0, %s22
    %s25 = sadd.s32 1, %s16
    %s26 = scalar_select %p23, %s25, %s16
    %p27 = scmp.ge.s32.totalorder %s26, 2
    %s28 = scalar_select %p27, 0, %s26
    %s29 = ssub.s32 %s16, %s28
    %s30 = ssub.s32 %s17, %s24
    %s31 = sor.u32 %s29, %s30
    %p32 = scmp.eq.s32.totalorder %s31, 0
    %s34 = sadd.s32 %s33, 1
    %s35 = scalar_select %p32, %s33, %s34
    %p38 = pneg %p32
    %p39 = scmp.eq.s32.totalorder %s9, 1
    %p40 = por %p38, %p39
    %p41 = scmp.ne.s32.totalorder %s33, %s36
    %p42 = scmp.eq.s32.totalorder %s9, 0
    %p43 = por %p41, %p42
    %p44 = scmp.ne.s32.totalorder %s33, %s36
    %p45 = scmp.eq.s32.totalorder %s14, 1
    %p46 = por %p44, %p45
    %p47 = scmp.ne.s32.totalorder %s36, %s37
    %p48 = scmp.eq.s32.totalorder %s14, 0
    %p49 = por %p47, %p48
    %p50 = scmp.ne.s32.totalorder %s36, %s37
    %p51 = scmp.eq.s32.totalorder %s15, 1
    %p52 = por %p50, %p51
    %p54 = scmp.ne.s32.totalorder %s37, %s53
    %p55 = scmp.eq.s32.totalorder %s15, 0
    %p56 = por %p54, %p55
    %s57 = ssub.s32 %s16, %s28
    %s58 = ssub.s32 %s17, %s24
    %s59 = sor.u32 %s57, %s58
    %p60 = scmp.eq.s32.totalorder %s59, 0
    %s62 = sadd.s32 %s61, 1
    %s63 = scalar_select %p60, %s61, %s62
    %p66 = pneg %p60
    %p67 = scmp.eq.s32.totalorder %s9, 1
    %p68 = por %p66, %p67
    %p69 = scmp.ne.s32.totalorder %s61, %s64
    %p70 = scmp.eq.s32.totalorder %s9, 0
    %p71 = por %p69, %p70
    %p72 = scmp.ne.s32.totalorder %s61, %s64
    %p73 = scmp.eq.s32.totalorder %s14, 1
    %p74 = por %p72, %p73
    %p75 = scmp.ne.s32.totalorder %s64, %s65
    %p76 = scmp.eq.s32.totalorder %s14, 0
    %p77 = por %p75, %p76
    %p78 = scmp.ne.s32.totalorder %s64, %s65
    %p79 = scmp.eq.s32.totalorder %s15, 1
    %p80 = por %p78, %p79
    %p82 = scmp.ne.s32.totalorder %s65, %s81
    %p83 = scmp.eq.s32.totalorder %s15, 0
    %p84 = por %p82, %p83
    %s86 = sadd.s32 %s85, 1
    %p89 = scmp.eq.s32.totalorder %s9, 1
    %p90 = scmp.ne.s32.totalorder %s85, %s87
    %p91 = scmp.eq.s32.totalorder %s9, 0
    %p92 = por %p90, %p91
    %p93 = scmp.ne.s32.totalorder %s85, %s87
    %p94 = scmp.eq.s32.totalorder %s14, 1
    %p95 = por %p93, %p94
    %p96 = scmp.ne.s32.totalorder %s87, %s88
    %p97 = scmp.eq.s32.totalorder %s14, 0
    %p98 = por %p96, %p97
    %p99 = scmp.ne.s32.totalorder %s87, %s88
    %p100 = scmp.eq.s32.totalorder %s15, 1
    %p101 = por %p99, %p100
    %p103 = scmp.ne.s32.totalorder %s88, %s102
    %p104 = scmp.eq.s32.totalorder %s15, 0
    %p105 = por %p103, %p104
    %s106 = ssub.s32 %s16, %s28
    %s107 = ssub.s32 %s17, %s24
    %s108 = sor.u32 %s106, %s107
    %p109 = scmp.eq.s32.totalorder %s108, 0
    %s111 = sadd.s32 %s110, 1
    %s112 = scalar_select %p109, %s110, %s111
    %p115 = pneg %p109
    %p116 = scmp.eq.s32.totalorder %s9, 1
    %p117 = por %p115, %p116
    %p118 = scmp.ne.s32.totalorder %s110, %s113
    %p119 = scmp.eq.s32.totalorder %s9, 0
    %p120 = por %p118, %p119
    %p121 = scmp.ne.s32.totalorder %s110, %s113
    %p122 = scmp.eq.s32.totalorder %s14, 1
    %p123 = por %p121, %p122
    %p124 = scmp.ne.s32.totalorder %s113, %s114
    %p125 = scmp.eq.s32.totalorder %s14, 0
    %p126 = por %p124, %p125
    %p127 = scmp.ne.s32.totalorder %s113, %s114
    %p128 = scmp.eq.s32.totalorder %s15, 1
    %p129 = por %p127, %p128
    %p131 = scmp.ne.s32.totalorder %s114, %s130
    %p132 = scmp.eq.s32.totalorder %s15, 0
    %p133 = por %p131, %p132
    %p134 = scmp.le.s32.totalorder 1, %s9
    %p135 = scmp.lt.s32.totalorder %s9, 3
    %p136 = pnand %p134, %p135
    %p137 = pneg %p136
    // Predicated region
    $region9: #{tpu_custom_call.1} parent=5 // pred_check
      _
    $region10: #{tpu_custom_call.1} parent=5 // pred_check_branch
      %139 = sbr.rel (%p136) target = $region12
    $region11: #{tpu_custom_call.1} parent=5 // pred_region
      %s140 = ssub.s32 %s9, 1
      // Predicated region
      $region13: #{tpu_custom_call.1} parent=11 // pred_check
        %p141 = pneg %p98
      $region14: #{tpu_custom_call.1} parent=11 // pred_check_branch
        %143 = sbr.rel (%p141) target = $region16
      $region15: #{tpu_custom_call.1} parent=11 // pred_region
        _
      $region16: #{tpu_custom_call.1} parent=11 // pred_fallthru
        _
    $region12: #{tpu_custom_call.1} parent=5 // pred_fallthru
      _
    %p144 = scmp.lt.s32.totalorder %s9, 2
    // Predicated region
    $region17: #{tpu_custom_call.1} parent=5 // pred_check
      %p145 = pneg %p144
    $region18: #{tpu_custom_call.1} parent=5 // pred_check_branch
      %147 = sbr.rel (%p145) target = $region20
    $region19: #{tpu_custom_call.1} parent=5 // pred_region
      // Predicated region
      $region21: #{tpu_custom_call.1} parent=19 // pred_check
        %p148 = pneg %p43
      $region22: #{tpu_custom_call.1} parent=19 // pred_check_branch
        %150 = sbr.rel (%p148) target = $region24
      $region23: #{tpu_custom_call.1} parent=19 // pred_region
        %p151 = scmp.lt.s32.totalorder %s16, 1
        %s152 = scalar_select %p151, %s16, 1
        %p153 = scmp.lt.s32.totalorder %s17, 0
        %s154 = scalar_select %p153, %s17, 0
        %s155 = smul.addr %s152, 2
        %s156 = sadd.s32 %s154, %s155
        %s157 = smul.addr %s156, 8
        %s158 = scalar_lea.vmem %s0, %s157
      $region24: #{tpu_custom_call.1} parent=19 // pred_fallthru
        _
      // Predicated region
      $region25: #{tpu_custom_call.1} parent=19 // pred_check
        %p159 = pneg %p71
      $region26: #{tpu_custom_call.1} parent=19 // pred_check_branch
        %161 = sbr.rel (%p159) target = $region28
      $region27: #{tpu_custom_call.1} parent=19 // pred_region
        %p162 = scmp.lt.s32.totalorder %s16, 1
        %s163 = scalar_select %p162, %s16, 1
        %p164 = scmp.lt.s32.totalorder %s17, 0
        %s165 = scalar_select %p164, %s17, 0
        %s166 = smul.addr %s163, 2
        %s167 = sadd.s32 %s165, %s166
        %s168 = smul.addr %s167, 4
        %s169 = scalar_lea.vmem %s1, %s168
      $region28: #{tpu_custom_call.1} parent=19 // pred_fallthru
        _
    $region20: #{tpu_custom_call.1} parent=5 // pred_fallthru
      _
    %p170 = scmp.le.s32.totalorder 1, %s9
    %p171 = scmp.lt.s32.totalorder %s9, 3
    %p172 = pnand %p170, %p171
    %p173 = pneg %p172
    // Predicated region
    $region29: #{tpu_custom_call.1} parent=5 // pred_check
      _
    $region30: #{tpu_custom_call.1} parent=5 // pred_check_branch
      %175 = sbr.rel (%p172) target = $region32
    $region31: #{tpu_custom_call.1} parent=5 // pred_region
      %s176 = ssub.s32 %s9, 1
      %p177 = scmp.lt.s32.totalorder %s18, 1
      %s178 = scalar_select %p177, %s18, 1
      %p179 = scmp.lt.s32.totalorder %s19, 0
      %s180 = scalar_select %p179, %s19, 0
      %s181 = smul.addr %s178, 2
      %s182 = sadd.s32 %s180, %s181
      %s183 = smul.addr %s182, 8
      %s184 = scalar_lea.vmem %s0, %s183
      %p185 = pneg %p49
      %p186 = pneg %p46
      %p187 = scmp.lt.s32.totalorder %s18, 1
      %s188 = scalar_select %p187, %s18, 1
      %p189 = scmp.lt.s32.totalorder %s19, 0
      %s190 = scalar_select %p189, %s19, 0
      %s191 = smul.addr %s188, 2
      %s192 = sadd.s32 %s190, %s191
      %s193 = smul.addr %s192, 4
      %s194 = scalar_lea.vmem %s1, %s193
      %p195 = pneg %p77
      %p196 = pneg %p74
      %p197 = pneg %p98
      %p198 = pneg %p95
      %p199 = pneg %p126
      %p200 = pneg %p123
      %p201 = scmp.lt.s32.totalorder %s18, 1
      %s202 = scalar_select %p201, %s18, 1
      %p203 = scmp.lt.s32.totalorder %s19, 0
      %s204 = scalar_select %p203, %s19, 0
      %s205 = smul.addr %s202, 4
      %s206 = sadd.s32 %s204, %s205
      %s207 = smul.addr %s206, 8
      %s208 = scalar_lea.vmem %s3, %s207
      %p209 = scmp.lt.s32.totalorder %s18, 1
      %s210 = scalar_select %p209, %s18, 1
      %p211 = scmp.lt.s32.totalorder %s19, 0
      %s212 = scalar_select %p211, %s19, 0
      %s213 = smul.addr %s210, 2
      %s214 = sadd.s32 %s212, %s213
      %s215 = smul.addr %s214, 8
      %s216 = scalar_lea.vmem %s0, %s215
      %p217 = scmp.lt.s32.totalorder %s18, 1
      %s218 = scalar_select %p217, %s18, 1
      %p219 = scmp.lt.s32.totalorder %s19, 0
      %s220 = scalar_select %p219, %s19, 0
      %s221 = smul.addr %s218, 2
      %s222 = sadd.s32 %s220, %s221
      %s223 = smul.addr %s222, 4
      %s224 = scalar_lea.vmem %s1, %s223
      %p225 = scmp.lt.s32.totalorder %s18, 1
      %s226 = scalar_select %p225, %s18, 1
      %p227 = scmp.lt.s32.totalorder %s19, 0
      %s228 = scalar_select %p227, %s19, 0
      %s229 = smul.addr %s226, 4
      %s230 = sadd.s32 %s228, %s229
      %s231 = smul.addr %s230, 8
      %s232 = scalar_lea.vmem %s3, %s231
      %v234 = vld [vmem:[%s216] sm:$0xff]
      %v235 = vld [vmem:[%s216 + $0x8] sm:$0xff]
      %v236 = vpack.c.bf16 %v235, %v234
      %v237 = vld [vmem:[%s2] sm:$0xf]
      %v238 = vld [vmem:[%s2 + $0x4] sm:$0xf]
      %v239 = vld [vmem:[%s2 + $0x8] sm:$0xf]
      %v240 = vld [vmem:[%s2 + $0xc] sm:$0xf]
      %v241 = vld [vmem:[%s224] sm:$0xf]
      %v242 = vld [vmem:[%s224 + $0x4] sm:$0xf]
      %v245 = vunpack.c.l.b16 %v241
      %v246 = vunpack.c.l.b16 %v242
      %v247 = vpack.c.b16 %v246, %v245
      %s248 = scalar_lea.vmem %s2, 16
      %v249 = vld [vmem:[%s248] sm:$0xf]
      %v250 = vld [vmem:[%s248 + $0x4] sm:$0xf]
      %v251 = vld [vmem:[%s248 + $0x8] sm:$0xf]
      %v252 = vld [vmem:[%s248 + $0xc] sm:$0xf]
      %v257 = vunpack.c.l.b16 %v249
      %v258 = vunpack.c.l.b16 %v250
      %v259 = vunpack.c.l.b16 %v251
      %v260 = vunpack.c.l.b16 %v252
      %v261 = vpack.c.b16 %v258, %v257
      %v262 = vpack.c.b16 %v260, %v259
      %264 = vrot.lane.b32.xlu0 %v236, 127
      %v265 = vpop.permute.xlu0 %264
      %266 = vrot.lane.b32.xlu0 %v247, 127
      %v267 = vpop.permute.xlu0 %266
      %vm268 = vcmask 1039360
      %v269 = vsel %vm268, %v265, %v267
      %vm271 = vcmask 130048
      %v273 = vsel %vm271, %v261, 0
      %v276 = vsel %vm271, %v262, 0
      %278 = vmatprep.subr.bf16.mxu0 0
      %279 = vmatpush1.bf16.msra.mxu0 %v269
      %280 = vmatprep.subr.bf16.mxu0 0
      %281 = vmatpush1.bf16.msra.mxu0 0
      %282 = vmatprep.subr.bf16.mxu0 0
      %283 = vmatpush1.bf16.msra.mxu0 0
      %284 = vmatprep.subr.bf16.mxu0 0
      %285 = vmatpush1.bf16.msra.mxu0 0
      %286 = vmatprep.subr.bf16.mxu0 0
      %287 = vmatpush1.bf16.msra.mxu0 0
      %288 = vmatprep.subr.bf16.mxu0 0
      %289 = vmatpush1.bf16.msra.mxu0 0
      %290 = vmatprep.subr.bf16.mxu0 0
      %291 = vmatpush1.bf16.msra.mxu0 0
      %292 = vmatprep.subr.bf16.mxu0 0
      %293 = vmatpush1.bf16.msra.mxu0 0
      %294 = vmatprep.subr.bf16.mxu0 0
      %295 = vmatpush1.bf16.msra.mxu0 0
      %296 = vmatprep.subr.bf16.mxu0 0
      %297 = vmatpush1.bf16.msra.mxu0 0
      %298 = vmatprep.subr.bf16.mxu0 0
      %299 = vmatpush1.bf16.msra.mxu0 0
      %300 = vmatprep.subr.bf16.mxu0 0
      %301 = vmatpush1.bf16.msra.mxu0 0
      %302 = vmatprep.subr.bf16.mxu0 0
      %303 = vmatpush1.bf16.msra.mxu0 0
      %304 = vmatprep.subr.bf16.mxu0 0
      %305 = vmatpush1.bf16.msra.mxu0 0
      %306 = vmatprep.subr.bf16.mxu0 0
      %307 = vmatpush1.bf16.msra.mxu0 0
      %308 = vmatprep.subr.bf16.mxu0 0
      %309 = vmatpush1.bf16.msra.mxu0 0
      %310 = vmatprep.mubr.bf16.mxu0 0
      %311 = vmatmul.mubr.bf16.gmra.mrb[0].mxu0 %v273
      %v312 = vpop.f32.mrb[0].mxu0
      %v313 = vadd.f32 0.0, %v312
      %v314 = vpop.f32.mrb[0].mxu0
      %v315 = vpop.f32.mrb[0].mxu0
      %v316 = vadd.f32 0.0, %v315
      %v317 = vpop.f32.mrb[0].mxu0
      %318 = vmatprep.mubr.bf16.mxu0 0
      %319 = vmatmul.mubr.bf16.gmra.mrb[0].mxu0 %v276
      %v320 = vpop.f32.mrb[0].mxu0
      %v321 = vadd.f32 0.0, %v320
      %v322 = vpop.f32.mrb[0].mxu0
      %v323 = vpop.f32.mrb[0].mxu0
      %v324 = vadd.f32 0.0, %v323
      %v325 = vpop.f32.mrb[0].mxu0
      %326 = vdwg.mxu0
      %v331 = vunpack.c.l.b16 %v237
      %v332 = vunpack.c.l.b16 %v238
      %v333 = vunpack.c.l.b16 %v239
      %v334 = vunpack.c.l.b16 %v240
      %v335 = vpack.c.b16 %v332, %v331
      %v336 = vpack.c.b16 %v334, %v333
      %v338 = vsel %vm271, %v335, 0
      %v341 = vsel %vm271, %v336, 0
      %343 = vmatprep.subr.bf16.mxu0 0
      %344 = vmatpush1.bf16.msra.mxu0 %v236
      %345 = vmatprep.subr.bf16.mxu0 0
      %346 = vmatpush1.bf16.msra.mxu0 0
      %347 = vmatprep.subr.bf16.mxu0 0
      %348 = vmatpush1.bf16.msra.mxu0 0
      %349 = vmatprep.subr.bf16.mxu0 0
      %350 = vmatpush1.bf16.msra.mxu0 0
      %351 = vmatprep.subr.bf16.mxu0 0
      %352 = vmatpush1.bf16.msra.mxu0 0
      %353 = vmatprep.subr.bf16.mxu0 0
      %354 = vmatpush1.bf16.msra.mxu0 0
      %355 = vmatprep.subr.bf16.mxu0 0
      %356 = vmatpush1.bf16.msra.mxu0 0
      %357 = vmatprep.subr.bf16.mxu0 0
      %358 = vmatpush1.bf16.msra.mxu0 0
      %359 = vmatprep.subr.bf16.mxu0 0
      %360 = vmatpush1.bf16.msra.mxu0 0
      %361 = vmatprep.subr.bf16.mxu0 0
      %362 = vmatpush1.bf16.msra.mxu0 0
      %363 = vmatprep.subr.bf16.mxu0 0
      %364 = vmatpush1.bf16.msra.mxu0 0
      %365 = vmatprep.subr.bf16.mxu0 0
      %366 = vmatpush1.bf16.msra.mxu0 0
      %367 = vmatprep.subr.bf16.mxu0 0
      %368 = vmatpush1.bf16.msra.mxu0 0
      %369 = vmatprep.subr.bf16.mxu0 0
      %370 = vmatpush1.bf16.msra.mxu0 0
      %371 = vmatprep.subr.bf16.mxu0 0
      %372 = vmatpush1.bf16.msra.mxu0 0
      %373 = vmatprep.subr.bf16.mxu0 0
      %374 = vmatpush1.bf16.msra.mxu0 0
      %375 = vmatprep.mubr.bf16.mxu0 0
      %376 = vmatmul.mubr.bf16.gmra.mrb[0].mxu0 %v338
      %v377 = vpop.f32.mrb[0].mxu0
      %v378 = vadd.f32 %v313, %v377
      %v379 = vpop.f32.mrb[0].mxu0
      %v380 = vpop.f32.mrb[0].mxu0
      %v381 = vadd.f32 %v316, %v380
      %v382 = vpop.f32.mrb[0].mxu0
      %383 = vmatprep.mubr.bf16.mxu0 0
      %384 = vmatmul.mubr.bf16.gmra.mrb[0].mxu0 %v341
      %v385 = vpop.f32.mrb[0].mxu0
      %v386 = vadd.f32 %v321, %v385
      %v387 = vpop.f32.mrb[0].mxu0
      %v388 = vpop.f32.mrb[0].mxu0
      %v389 = vadd.f32 %v324, %v388
      %v390 = vpop.f32.mrb[0].mxu0
      %391 = vdwg.mxu0
      %v392 = vmax.f32 %v378, 0.0
      %v393 = vmax.f32 %v381, 0.0
      %v394 = vmax.f32 %v386, 0.0
      %v395 = vmax.f32 %v389, 0.0
      %396 = vst [vmem:[%s232] sm:$0xff] %v392
      %397 = vst [vmem:[%s232 + $0x8] sm:$0xff] %v393
      %398 = vst [vmem:[%s232 + $0x10] sm:$0xff] %v394
      %399 = vst [vmem:[%s232 + $0x18] sm:$0xff] %v395
      %p400 = scmp.lt.s32.totalorder %s18, 1
      %s401 = scalar_select %p400, %s18, 1
      %p402 = scmp.lt.s32.totalorder %s19, 0
      %s403 = scalar_select %p402, %s19, 0
      %s404 = smul.addr %s401, 4
      %s405 = sadd.s32 %s403, %s404
      %s406 = smul.addr %s405, 8
      %s407 = scalar_lea.vmem %s3, %s406
      // Predicated region
      $region33: #{tpu_custom_call.1} parent=31 // pred_check
        %p408 = pneg %p123
      $region34: #{tpu_custom_call.1} parent=31 // pred_check_branch
        %410 = sbr.rel (%p408) target = $region36
      $region35: #{tpu_custom_call.1} parent=31 // pred_region
        _
      $region36: #{tpu_custom_call.1} parent=31 // pred_fallthru
        _
    $region32: #{tpu_custom_call.1} parent=5 // pred_fallthru
      _
    %p411 = scmp.le.s32.totalorder 2, %s9
    // Predicated region
    $region37: #{tpu_custom_call.1} parent=5 // pred_check
      %p412 = pneg %p411
    $region38: #{tpu_custom_call.1} parent=5 // pred_check_branch
      %414 = sbr.rel (%p412) target = $region40
    $region39: #{tpu_custom_call.1} parent=5 // pred_region
      %s415 = ssub.s32 %s9, 2
      // Predicated region
      $region41: #{tpu_custom_call.1} parent=39 // pred_check
        %p416 = pneg %p129
      $region42: #{tpu_custom_call.1} parent=39 // pred_check_branch
        %418 = sbr.rel (%p416) target = $region44
      $region43: #{tpu_custom_call.1} parent=39 // pred_region
        %p419 = scmp.lt.s32.totalorder %s20, 1
        %s420 = scalar_select %p419, %s20, 1
        %p421 = scmp.lt.s32.totalorder %s21, 0
        %s422 = scalar_select %p421, %s21, 0
        %s423 = smul.addr %s420, 4
        %s424 = sadd.s32 %s422, %s423
        %s425 = smul.addr %s424, 8
        %s426 = scalar_lea.vmem %s3, %s425
      $region44: #{tpu_custom_call.1} parent=39 // pred_fallthru
        _
    $region40: #{tpu_custom_call.1} parent=5 // pred_fallthru
      _
  $region6: #{tpu_custom_call.1} parent=0 // loop_footer
    %s13 = sadd.s32 1, %s9
  $region7: #{tpu_custom_call.1} parent=0 // loop_footer_branch
    %8 = sbr.rel target = $region3
  $region8: #{tpu_custom_call.1} parent=0 // loop_exit
    _

</llo_original>
